<compile_context>
chip_gen: v6e
topology: v6e:2x2x1
jax: 0.10.0
libtpu: 0.0.40
codegen_flags: <defaults>
</compile_context>

<pallas_src>
import jax
import jax.numpy as jnp
from jax.experimental import pallas as pl
from jax.experimental.pallas import tpu as pltpu


def _round_up(x, m):
    return ((x + m - 1) // m) * m


def _actor_kernel(s_ref, w_ref, b_ref, o_ref):
    # s_ref: (TB, S)   w_ref: (S, Ap)   b_ref: (1, Ap)   o_ref: (TB, Ap)
    # MXU matmul, f32 accumulation; bias add + tanh run on VPU/EUP in f32.
    logits = jnp.dot(s_ref[...], w_ref[...], preferred_element_type=jnp.float32)
    o_ref[...] = jnp.tanh(logits + b_ref[...]).astype(o_ref.dtype)


def _actor_forward_pallas(state, weight, bias, *, block_batch=512):
    B, S = state.shape
    A = weight.shape[1]

    # Lane-dense output slab: keep the store path unmasked (A=2 would lower to
    # masked vst.msk partial stores, the biggest store-side lever).
    Ap = _round_up(max(A, 128), 128)

    # bf16 dot inputs only pay off for wide feature dims; keep f32 for tiny S.
    dot_dtype = jnp.bfloat16 if S >= 256 else jnp.float32

    # Pad only the tiny parameters along the action axis (once per call).
    w_p = jnp.pad(weight.astype(jnp.float32), ((0, 0), (0, Ap - A))).astype(dot_dtype)
    b_p = jnp.pad(bias.astype(jnp.float32)[None, :], ((0, 0), (0, Ap - A)))

    # Batch tile (multiple of 8 sublanes); sized well under the 32 MiB default
    # scoped-VMEM budget even with double-buffered state + output blocks.
    TB = min(block_batch, _round_up(B, 8))
    Bp = _round_up(B, TB)
    s_p = state.astype(dot_dtype)
    if Bp != B:
        s_p = jnp.pad(s_p, ((0, Bp - B), (0, 0)))

    out_p = pl.pallas_call(
        _actor_kernel,
        out_shape=jax.ShapeDtypeStruct((Bp, Ap), jnp.float32),
        grid_spec=pltpu.PrefetchScalarGridSpec(
            num_scalar_prefetch=0,
            grid=(Bp // TB,),
            in_specs=[
                # state: streamed per batch tile, feature dim left unpadded
                # (full-extent dim is exempt from the (8,128) rule).
                pl.BlockSpec((TB, S), lambda i: (i, 0)),
                # weight / bias: resident across the whole grid.
                pl.BlockSpec((S, Ap), lambda i: (0, 0)),
                pl.BlockSpec((1, Ap), lambda i: (0, 0)),
            ],
            out_specs=pl.BlockSpec((TB, Ap), lambda i: (i, 0)),
        ),
        compiler_params=pltpu.CompilerParams(
            # Batch axis is independent -> megacore sharding on v7x.
            dimension_semantics=("parallel",),
        ),
    )(s_p, w_p, b_p)

    if Bp != B or Ap != A:
        out_p = out_p[:B, :A]
    return out_p


def actor_forward(state, weight, bias, *, min_pallas_batch=512, block_batch=512):
    """state: (B, state_dim) f32; weight: (state_dim, action_dim); bias: (action_dim,)."""
    B = state.shape[0]
    if B < min_pallas_batch:
        # Tiny batch: a single fused XLA dot+tanh beats any pallas_call
        # (launch + DMA setup + 0.35 us/step grid overhead dominate).
        return jnp.tanh(state.astype(jnp.float32) @ weight.astype(jnp.float32)
                        + bias.astype(jnp.float32))
    return _actor_forward_pallas(state, weight, bias, block_batch=block_batch)


if __name__ == "__main__":
    key = jax.random.PRNGKey(0)
    k_s, k_w, k_b = jax.random.split(key, 3)

    batch = 1024       # large enough to take the batch-tiled Pallas path
    state_dim = 4      # ActorNetwork(state_dim=4, ...)
    action_dim = 2     # ActorNetwork(action_dim=2, ...)

    # Deterministic synthetic parameters (module defines no real layers).
    state = jax.random.normal(k_s, (batch, state_dim), dtype=jnp.float32)
    weight = jax.random.normal(k_w, (state_dim, action_dim), dtype=jnp.float32) * 0.1
    bias = jax.random.normal(k_b, (action_dim,), dtype=jnp.float32) * 0.01

    # Large-batch path -> Pallas kernel.
    out = actor_forward(state, weight, bias)
    jax.block_until_ready(out)

    ref = jnp.tanh(state @ weight + bias)
    assert out.shape == (batch, action_dim)
    assert jnp.allclose(out, ref, atol=1e-5), "mismatch vs reference (pallas path)"

    # Tiny-batch path -> fused XLA (no pallas overhead), same numerics.
    small = state[:8]
    out_small = actor_forward(small, weight, bias)
    jax.block_until_ready(out_small)
    assert out_small.shape == (8, action_dim)
    assert jnp.allclose(out_small, jnp.tanh(small @ weight + bias), atol=1e-5), \
        "mismatch vs reference (xla path)"

    print("KERNEL_OK")
</pallas_src>

<mosaic_0001>
module attributes {stable_mosaic.version = 11 : i64} {
  func.func @_actor_kernel(%arg0: i32, %arg1: memref<512x4xf32, #tpu.memory_space<vmem>>, %arg2: memref<4x128xf32, #tpu.memory_space<vmem>>, %arg3: memref<1x128xf32, #tpu.memory_space<vmem>>, %arg4: memref<512x128xf32, #tpu.memory_space<vmem>>) attributes {dimension_semantics = [#tpu.dimension_semantics<parallel>], iteration_bounds = array<i64: 2>, scalar_prefetch = 0 : i64, scratch_operands = 0 : i64, tpu.core_type = #tpu.core_type<tc>, window_params = [{transform_indices = @transform_0, window_bounds = array<i64: 512, 4>}, {pipeline_mode = #tpu.pipeline_mode<synchronous>, transform_indices = @transform_1, window_bounds = array<i64: 4, 128>}, {pipeline_mode = #tpu.pipeline_mode<synchronous>, transform_indices = @transform_2, window_bounds = array<i64: 1, 128>}, {transform_indices = @transform_3, window_bounds = array<i64: 512, 128>}]} {
    %c0 = arith.constant 0 : index
    %c0_0 = arith.constant 0 : index
    %0 = vector.load %arg1[%c0, %c0_0] : memref<512x4xf32, #tpu.memory_space<vmem>>, vector<512x4xf32>
    %c0_1 = arith.constant 0 : index
    %c0_2 = arith.constant 0 : index
    %1 = vector.load %arg2[%c0_1, %c0_2] : memref<4x128xf32, #tpu.memory_space<vmem>>, vector<4x128xf32>
    %cst = arith.constant dense<0.000000e+00> : vector<512x128xf32>
    %2 = tpu.matmul %0, %1, %cst {dimension_numbers = #tpu.dot_dimension_numbers<[1], [0], [0], [1], [0, 0, 1, 1], [], []>} : vector<512x4xf32>, vector<4x128xf32>, vector<512x128xf32> -> vector<512x128xf32>
    %c0_3 = arith.constant 0 : index
    %c0_4 = arith.constant 0 : index
    %3 = vector.load %arg3[%c0_3, %c0_4] : memref<1x128xf32, #tpu.memory_space<vmem>>, vector<1x128xf32>
    %4 = vector.broadcast %3 : vector<1x128xf32> to vector<512x128xf32>
    %5 = arith.addf %2, %4 : vector<512x128xf32>
    %6 = math.tanh %5 : vector<512x128xf32>
    %c0_5 = arith.constant 0 : index
    %c0_6 = arith.constant 0 : index
    %7 = vector.load %arg4[%c0_5, %c0_6] : memref<512x128xf32, #tpu.memory_space<vmem>>, vector<512x128xf32>
    tpu.vector_store %arg4[%c0_5, %c0_6], %6 {strides = array<i32>} : memref<512x128xf32, #tpu.memory_space<vmem>>, vector<512x128xf32>,
    return
  }
  func.func @transform_0(%arg0: i32) -> (i32, i32) {
    %c0_i32 = arith.constant 0 : i32
    %c0_i32_0 = arith.constant 0 : i32
    return %arg0, %c0_i32 : i32, i32
  }
  func.func @transform_1(%arg0: i32) -> (i32, i32) {
    %c0_i32 = arith.constant 0 : i32
    %c0_i32_0 = arith.constant 0 : i32
    %c0_i32_1 = arith.constant 0 : i32
    return %c0_i32, %c0_i32_0 : i32, i32
  }
  func.func @transform_2(%arg0: i32) -> (i32, i32) {
    %c0_i32 = arith.constant 0 : i32
    %c0_i32_0 = arith.constant 0 : i32
    %c0_i32_1 = arith.constant 0 : i32
    return %c0_i32, %c0_i32_0 : i32, i32
  }
  func.func @transform_3(%arg0: i32) -> (i32, i32) {
    %c0_i32 = arith.constant 0 : i32
    %c0_i32_0 = arith.constant 0 : i32
    return %arg0, %c0_i32 : i32, i32
  }
}

</mosaic_0001>

<llo_original>
// kernel: tpu_custom_call.1
$region0: #{tpu_custom_call.1}
  #allocation0 [shape = 'u32[]', space=smem, size = 0x4, offset = 0x4, fixed_abs, tag = 'smem constant byte address 0x4 - core index']
  #allocation1 [shape = 'u32[144,128]{1,0:T(1,128)}', space=vmem, size = 0x12000, scoped, tag = 'internal scratch']
  %s0 = inlined_call_operand.vmem [shape: f32[1024,4], index: 0, kind: input, shape index: {}]
  %s1 = inlined_call_operand.vmem [shape: f32[4,128], index: 1, kind: input, shape index: {}]
  %s2 = inlined_call_operand.vmem [shape: f32[1,128], index: 2, kind: input, shape index: {}]
  %s3 = inlined_call_operand.hbm [shape: f32[1024,128], index: 3, kind: output, shape index: {}]
  %s4 = sld [smem:[#allocation0]]
  $region45: #{tpu_custom_call.1} parent=0
    _
  %s6 = ssub.s32 1, %s4
  %s7 = scalar_select 0, %s6, %s4
  $region1: #{tpu_custom_call.1} parent=0
    #allocation2 [shape = 'u8[524288]{0}', space=vmem, size = 0x80000, scoped, tag = 'output window, operand 0']
    #allocation3 [shape = 's32[2]{0}', space=sflag, size = 0x8, scoped, tag = 'scoped memory for tpu_custom_call.1']
    %8 = vsyncpa [#allocation3], 0
    %s9 = scalar_lea.sflag [#allocation3], 1
    %10 = vsyncpa %s9, 0
    loop: start=0, step=1, limit=4
    $region2: #{tpu_custom_call.1} parent=1 // loop_pre_header
      _
    $region3: #{tpu_custom_call.1} parent=1 // loop_header
      %s12 = sphi 0, %s16
      %p13 = scmp.ge.s32.totalorder %s12, 4
      %s22 = sphi 0, %s24
      %s25 = sphi 0, %s22
      %s26 = sphi 0, %s25
      %s42 = sphi 0, %s26
      %s46 = sphi 0, %s46
      %s48 = sphi 0, %s46
      %s49 = sphi 0, %s48
      %s63 = sphi 0, %s49
      %s67 = sphi 0, %s67
      %s69 = sphi 0, %s67
      %s70 = sphi 0, %s69
      %s84 = sphi 0, %s70
      %s90 = sphi 0, %s92
      %s93 = sphi 0, %s90
      %s94 = sphi 0, %s93
      %s110 = sphi 0, %s94
    $region4: #{tpu_custom_call.1} parent=1 // loop_header_branch
      %15 = sbr.rel (%p13) target = $region8
    $region5: #{tpu_custom_call.1} parent=1 // loop_body
      %s17 = ssub.s32 %s12, 1
      %s18 = ssub.s32 %s12, 2
      %s19 = sadd.s32 %s12, 1
      %s20 = ssub.s32 %s12, %s19
      %p21 = scmp.eq.s32.totalorder %s20, 0
      %s23 = sadd.s32 %s22, 1
      %s24 = scalar_select %p21, %s22, %s23
      %p27 = pneg %p21
      %p28 = scmp.eq.s32.totalorder %s12, 1
      %p29 = por %p27, %p28
      %p30 = scmp.ne.s32.totalorder %s22, %s25
      %p31 = scmp.eq.s32.totalorder %s12, 0
      %p32 = por %p30, %p31
      %p33 = scmp.ne.s32.totalorder %s22, %s25
      %p34 = scmp.eq.s32.totalorder %s17, 1
      %p35 = por %p33, %p34
      %p36 = scmp.ne.s32.totalorder %s25, %s26
      %p37 = scmp.eq.s32.totalorder %s17, 0
      %p38 = por %p36, %p37
      %p39 = scmp.ne.s32.totalorder %s25, %s26
      %p40 = scmp.eq.s32.totalorder %s18, 1
      %p41 = por %p39, %p40
      %p43 = scmp.ne.s32.totalorder %s26, %s42
      %p44 = scmp.eq.s32.totalorder %s18, 0
      %p45 = por %p43, %p44
      %s47 = sadd.s32 %s46, 1
      %p50 = scmp.eq.s32.totalorder %s12, 1
      %p51 = scmp.ne.s32.totalorder %s46, %s48
      %p52 = scmp.eq.s32.totalorder %s12, 0
      %p53 = por %p51, %p52
      %p54 = scmp.ne.s32.totalorder %s46, %s48
      %p55 = scmp.eq.s32.totalorder %s17, 1
      %p56 = por %p54, %p55
      %p57 = scmp.ne.s32.totalorder %s48, %s49
      %p58 = scmp.eq.s32.totalorder %s17, 0
      %p59 = por %p57, %p58
      %p60 = scmp.ne.s32.totalorder %s48, %s49
      %p61 = scmp.eq.s32.totalorder %s18, 1
      %p62 = por %p60, %p61
      %p64 = scmp.ne.s32.totalorder %s49, %s63
      %p65 = scmp.eq.s32.totalorder %s18, 0
      %p66 = por %p64, %p65
      %s68 = sadd.s32 %s67, 1
      %p71 = scmp.eq.s32.totalorder %s12, 1
      %p72 = scmp.ne.s32.totalorder %s67, %s69
      %p73 = scmp.eq.s32.totalorder %s12, 0
      %p74 = por %p72, %p73
      %p75 = scmp.ne.s32.totalorder %s67, %s69
      %p76 = scmp.eq.s32.totalorder %s17, 1
      %p77 = por %p75, %p76
      %p78 = scmp.ne.s32.totalorder %s69, %s70
      %p79 = scmp.eq.s32.totalorder %s17, 0
      %p80 = por %p78, %p79
      %p81 = scmp.ne.s32.totalorder %s69, %s70
      %p82 = scmp.eq.s32.totalorder %s18, 1
      %p83 = por %p81, %p82
      %p85 = scmp.ne.s32.totalorder %s70, %s84
      %p86 = scmp.eq.s32.totalorder %s18, 0
      %p87 = por %p85, %p86
      %s88 = ssub.s32 %s12, %s19
      %p89 = scmp.eq.s32.totalorder %s88, 0
      %s91 = sadd.s32 %s90, 1
      %s92 = scalar_select %p89, %s90, %s91
      %p95 = pneg %p89
      %p96 = scmp.eq.s32.totalorder %s12, 1
      %p97 = por %p95, %p96
      %p98 = scmp.ne.s32.totalorder %s90, %s93
      %p99 = scmp.eq.s32.totalorder %s12, 0
      %p100 = por %p98, %p99
      %p101 = scmp.ne.s32.totalorder %s90, %s93
      %p102 = scmp.eq.s32.totalorder %s17, 1
      %p103 = por %p101, %p102
      %p104 = scmp.ne.s32.totalorder %s93, %s94
      %p105 = scmp.eq.s32.totalorder %s17, 0
      %p106 = por %p104, %p105
      %p107 = scmp.ne.s32.totalorder %s93, %s94
      %p108 = scmp.eq.s32.totalorder %s18, 1
      %p109 = por %p107, %p108
      %p111 = scmp.ne.s32.totalorder %s94, %s110
      %p112 = scmp.eq.s32.totalorder %s18, 0
      %p113 = por %p111, %p112
      %p114 = scmp.le.s32.totalorder 1, %s12
      %p115 = scmp.lt.s32.totalorder %s12, 3
      %p116 = pnand %p114, %p115
      %p117 = pneg %p116
      // Predicated region
      $region9: #{tpu_custom_call.1} parent=5 // pred_check
        _
      $region10: #{tpu_custom_call.1} parent=5 // pred_check_branch
        %119 = sbr.rel (%p116) target = $region12
      $region11: #{tpu_custom_call.1} parent=5 // pred_region
        %s120 = ssub.s32 %s12, 1
        // Predicated region
        $region13: #{tpu_custom_call.1} parent=11 // pred_check
          %p121 = pneg %p59
        $region14: #{tpu_custom_call.1} parent=11 // pred_check_branch
          %123 = sbr.rel (%p121) target = $region16
        $region15: #{tpu_custom_call.1} parent=11 // pred_region
          _
        $region16: #{tpu_custom_call.1} parent=11 // pred_fallthru
          _
        // Predicated region
        $region17: #{tpu_custom_call.1} parent=11 // pred_check
          %p124 = pneg %p80
        $region18: #{tpu_custom_call.1} parent=11 // pred_check_branch
          %126 = sbr.rel (%p124) target = $region20
        $region19: #{tpu_custom_call.1} parent=11 // pred_region
          _
        $region20: #{tpu_custom_call.1} parent=11 // pred_fallthru
          _
      $region12: #{tpu_custom_call.1} parent=5 // pred_fallthru
        _
      %p127 = scmp.lt.s32.totalorder %s12, 2
      // Predicated region
      $region21: #{tpu_custom_call.1} parent=5 // pred_check
        %p128 = pneg %p127
      $region22: #{tpu_custom_call.1} parent=5 // pred_check_branch
        %130 = sbr.rel (%p128) target = $region24
      $region23: #{tpu_custom_call.1} parent=5 // pred_region
        // Predicated region
        $region25: #{tpu_custom_call.1} parent=23 // pred_check
          %p131 = pneg %p32
        $region26: #{tpu_custom_call.1} parent=23 // pred_check_branch
          %133 = sbr.rel (%p131) target = $region28
        $region27: #{tpu_custom_call.1} parent=23 // pred_region
          %s134 = smul.u32 64, %s12
          %p135 = scmp.lt.s32.totalorder %s134, 127
          %s136 = scalar_select %p135, %s134, 127
          %s137 = smul.addr %s136, 8
          %s138 = scalar_lea.vmem %s0, %s137
          %s139 = smul.u32 64, %s12
        $region28: #{tpu_custom_call.1} parent=23 // pred_fallthru
          _
      $region24: #{tpu_custom_call.1} parent=5 // pred_fallthru
        _
      %p140 = scmp.le.s32.totalorder 1, %s12
      %p141 = scmp.lt.s32.totalorder %s12, 3
      %p142 = pnand %p140, %p141
      %p143 = pneg %p142
      // Predicated region
      $region29: #{tpu_custom_call.1} parent=5 // pred_check
        _
      $region30: #{tpu_custom_call.1} parent=5 // pred_check_branch
        %145 = sbr.rel (%p142) target = $region32
      $region31: #{tpu_custom_call.1} parent=5 // pred_region
        %s146 = ssub.s32 %s12, 1
        %s147 = smul.u32 64, %s17
        %p148 = scmp.lt.s32.totalorder %s147, 127
        %s149 = scalar_select %p148, %s147, 127
        %s150 = smul.addr %s149, 8
        %s151 = scalar_lea.vmem %s0, %s150
        %p152 = pneg %p38
        %p153 = pneg %p35
        %p154 = pneg %p59
        %p155 = pneg %p56
        %p156 = pneg %p80
        %p157 = pneg %p77
        %p158 = pneg %p106
        %p159 = pneg %p103
        %s160 = sand.u32 %s93, 1
        %s161 = scalar_lea.sflag [#allocation3], %s160
        %s162 = sand.u32 %s93, 1
        %s163 = smul.addr %s162, 512
        %s164 = scalar_lea.vmem [#allocation2], %s163
        %s165 = smul.u32 64, %s17
        %p166 = scmp.lt.s32.totalorder %s165, 127
        %s167 = scalar_select %p166, %s165, 127
        %s168 = smul.addr %s167, 8
        %s169 = scalar_lea.vmem %s0, %s168
        %s170 = smul.u32 64, %s17
        %s171 = smul.u32 64, %s17
        %v172 = vld [vmem:[%s169] sm:$0xff]
        %v173 = vld [vmem:[%s169 + $0x8] sm:$0xff]
        %v174 = vld [vmem:[%s169 + $0x10] sm:$0xff]
        %v175 = vld [vmem:[%s169 + $0x18] sm:$0xff]
        %v176 = vld [vmem:[%s169 + $0x20] sm:$0xff]
        %v177 = vld [vmem:[%s169 + $0x28] sm:$0xff]
        %v178 = vld [vmem:[%s169 + $0x30] sm:$0xff]
        %v179 = vld [vmem:[%s169 + $0x38] sm:$0xff]
        %v180 = vld [vmem:[%s169 + $0x40] sm:$0xff]
        %v181 = vld [vmem:[%s169 + $0x48] sm:$0xff]
        %v182 = vld [vmem:[%s169 + $0x50] sm:$0xff]
        %v183 = vld [vmem:[%s169 + $0x58] sm:$0xff]
        %v184 = vld [vmem:[%s169 + $0x60] sm:$0xff]
        %v185 = vld [vmem:[%s169 + $0x68] sm:$0xff]
        %v186 = vld [vmem:[%s169 + $0x70] sm:$0xff]
        %v187 = vld [vmem:[%s169 + $0x78] sm:$0xff]
        %v188 = vld [vmem:[%s169 + $0x80] sm:$0xff]
        %v189 = vld [vmem:[%s169 + $0x88] sm:$0xff]
        %v190 = vld [vmem:[%s169 + $0x90] sm:$0xff]
        %v191 = vld [vmem:[%s169 + $0x98] sm:$0xff]
        %v192 = vld [vmem:[%s169 + $0xa0] sm:$0xff]
        %v193 = vld [vmem:[%s169 + $0xa8] sm:$0xff]
        %v194 = vld [vmem:[%s169 + $0xb0] sm:$0xff]
        %v195 = vld [vmem:[%s169 + $0xb8] sm:$0xff]
        %v196 = vld [vmem:[%s169 + $0xc0] sm:$0xff]
        %v197 = vld [vmem:[%s169 + $0xc8] sm:$0xff]
        %v198 = vld [vmem:[%s169 + $0xd0] sm:$0xff]
        %v199 = vld [vmem:[%s169 + $0xd8] sm:$0xff]
        %v200 = vld [vmem:[%s169 + $0xe0] sm:$0xff]
        %v201 = vld [vmem:[%s169 + $0xe8] sm:$0xff]
        %v202 = vld [vmem:[%s169 + $0xf0] sm:$0xff]
        %v203 = vld [vmem:[%s169 + $0xf8] sm:$0xff]
        %v204 = vld [vmem:[%s169 + $0x100] sm:$0xff]
        %v205 = vld [vmem:[%s169 + $0x108] sm:$0xff]
        %v206 = vld [vmem:[%s169 + $0x110] sm:$0xff]
        %v207 = vld [vmem:[%s169 + $0x118] sm:$0xff]
        %v208 = vld [vmem:[%s169 + $0x120] sm:$0xff]
        %v209 = vld [vmem:[%s169 + $0x128] sm:$0xff]
        %v210 = vld [vmem:[%s169 + $0x130] sm:$0xff]
        %v211 = vld [vmem:[%s169 + $0x138] sm:$0xff]
        %v212 = vld [vmem:[%s169 + $0x140] sm:$0xff]
        %v213 = vld [vmem:[%s169 + $0x148] sm:$0xff]
        %v214 = vld [vmem:[%s169 + $0x150] sm:$0xff]
        %v215 = vld [vmem:[%s169 + $0x158] sm:$0xff]
        %v216 = vld [vmem:[%s169 + $0x160] sm:$0xff]
        %v217 = vld [vmem:[%s169 + $0x168] sm:$0xff]
        %v218 = vld [vmem:[%s169 + $0x170] sm:$0xff]
        %v219 = vld [vmem:[%s169 + $0x178] sm:$0xff]
        %v220 = vld [vmem:[%s169 + $0x180] sm:$0xff]
        %v221 = vld [vmem:[%s169 + $0x188] sm:$0xff]
        %v222 = vld [vmem:[%s169 + $0x190] sm:$0xff]
        %v223 = vld [vmem:[%s169 + $0x198] sm:$0xff]
        %v224 = vld [vmem:[%s169 + $0x1a0] sm:$0xff]
        %v225 = vld [vmem:[%s169 + $0x1a8] sm:$0xff]
        %v226 = vld [vmem:[%s169 + $0x1b0] sm:$0xff]
        %v227 = vld [vmem:[%s169 + $0x1b8] sm:$0xff]
        %v228 = vld [vmem:[%s169 + $0x1c0] sm:$0xff]
        %v229 = vld [vmem:[%s169 + $0x1c8] sm:$0xff]
        %v230 = vld [vmem:[%s169 + $0x1d0] sm:$0xff]
        %v231 = vld [vmem:[%s169 + $0x1d8] sm:$0xff]
        %v232 = vld [vmem:[%s169 + $0x1e0] sm:$0xff]
        %v233 = vld [vmem:[%s169 + $0x1e8] sm:$0xff]
        %v234 = vld [vmem:[%s169 + $0x1f0] sm:$0xff]
        %v235 = vld [vmem:[%s169 + $0x1f8] sm:$0xff]
        %v236 = vld [vmem:[%s1] sm:$0xf]
        %v237 = vld [vmem:[%s2] sm:$0x1]
        %v239 = vlaneseq
        %v240 = vshrl.u32 %v239, 7
        %v241 = vsub.s32 0, %v240
        %v242 = vrot.slane %v237, %v241
        %vm244 = vcmask 31744
        %v246 = vsel %vm244, %v172, 0
        %v249 = vsel %vm244, %v173, 0
        %v252 = vsel %vm244, %v174, 0
        %v255 = vsel %vm244, %v175, 0
        %v258 = vsel %vm244, %v176, 0
        %v261 = vsel %vm244, %v177, 0
        %v264 = vsel %vm244, %v178, 0
        %v267 = vsel %vm244, %v179, 0
        %v270 = vsel %vm244, %v180, 0
        %v273 = vsel %vm244, %v181, 0
        %v276 = vsel %vm244, %v182, 0
        %v279 = vsel %vm244, %v183, 0
        %v282 = vsel %vm244, %v184, 0
        %v285 = vsel %vm244, %v185, 0
        %v288 = vsel %vm244, %v186, 0
        %v291 = vsel %vm244, %v187, 0
        %v294 = vsel %vm244, %v188, 0
        %v297 = vsel %vm244, %v189, 0
        %v300 = vsel %vm244, %v190, 0
        %v303 = vsel %vm244, %v191, 0
        %v306 = vsel %vm244, %v192, 0
        %v309 = vsel %vm244, %v193, 0
        %v312 = vsel %vm244, %v194, 0
        %v315 = vsel %vm244, %v195, 0
        %v318 = vsel %vm244, %v196, 0
        %v321 = vsel %vm244, %v197, 0
        %v324 = vsel %vm244, %v198, 0
        %v327 = vsel %vm244, %v199, 0
        %v330 = vsel %vm244, %v200, 0
        %v333 = vsel %vm244, %v201, 0
        %v336 = vsel %vm244, %v202, 0
        %v339 = vsel %vm244, %v203, 0
        %v342 = vsel %vm244, %v204, 0
        %v345 = vsel %vm244, %v205, 0
        %v348 = vsel %vm244, %v206, 0
        %v351 = vsel %vm244, %v207, 0
        %v354 = vsel %vm244, %v208, 0
        %v357 = vsel %vm244, %v209, 0
        %v360 = vsel %vm244, %v210, 0
        %v363 = vsel %vm244, %v211, 0
        %v366 = vsel %vm244, %v212, 0
        %v369 = vsel %vm244, %v213, 0
        %v372 = vsel %vm244, %v214, 0
        %v375 = vsel %vm244, %v215, 0
        %v378 = vsel %vm244, %v216, 0
        %v381 = vsel %vm244, %v217, 0
        %v384 = vsel %vm244, %v218, 0
        %v387 = vsel %vm244, %v219, 0
        %v390 = vsel %vm244, %v220, 0
        %v393 = vsel %vm244, %v221, 0
        %v396 = vsel %vm244, %v222, 0
        %v399 = vsel %vm244, %v223, 0
        %v402 = vsel %vm244, %v224, 0
        %v405 = vsel %vm244, %v225, 0
        %v408 = vsel %vm244, %v226, 0
        %v411 = vsel %vm244, %v227, 0
        %v414 = vsel %vm244, %v228, 0
        %v417 = vsel %vm244, %v229, 0
        %v420 = vsel %vm244, %v230, 0
        %v423 = vsel %vm244, %v231, 0
        %v426 = vsel %vm244, %v232, 0
        %v429 = vsel %vm244, %v233, 0
        %v432 = vsel %vm244, %v234, 0
        %v435 = vsel %vm244, %v235, 0
        %vm437 = vcmask 1043456
        %v439 = vsel %vm437, %v236, 0
        %441 = vmatprep.subr.mxu0 0.0
        %442 = vmatpush1.msra.mxu0 0.0
        %443 = vmatprep.subr.mxu0 0.0
        %444 = vmatpush1.msra.mxu0 0.0
        %445 = vmatprep.subr.mxu0 0.0
        %446 = vmatpush1.msra.mxu0 0.0
        %447 = vmatprep.subr.mxu0 0.0
        %448 = vmatpush1.msra.mxu0 0.0
        %449 = vmatprep.subr.mxu0 0.0
        %450 = vmatpush1.msra.mxu0 0.0
        %451 = vmatprep.subr.mxu0 0.0
        %452 = vmatpush1.msra.mxu0 0.0
        %453 = vmatprep.subr.mxu0 0.0
        %454 = vmatpush1.msra.mxu0 0.0
        %455 = vmatprep.subr.mxu0 0.0
        %456 = vmatpush1.msra.mxu0 0.0
        %457 = vmatprep.subr.mxu0 0.0
        %458 = vmatpush1.msra.mxu0 0.0
        %459 = vmatprep.subr.mxu0 0.0
        %460 = vmatpush1.msra.mxu0 0.0
        %461 = vmatprep.subr.mxu0 0.0
        %462 = vmatpush1.msra.mxu0 0.0
        %463 = vmatprep.subr.mxu0 0.0
        %464 = vmatpush1.msra.mxu0 0.0
        %465 = vmatprep.subr.mxu0 0.0
        %466 = vmatpush1.msra.mxu0 0.0
        %467 = vmatprep.subr.mxu0 0.0
        %468 = vmatpush1.msra.mxu0 0.0
        %469 = vmatprep.subr.mxu0 0.0
        %470 = vmatpush1.msra.mxu0 0.0
        %471 = vmatprep.subr.mxu0 0.0
        %472 = vmatpush1.msra.mxu0 %v439
        %473 = vmatprep.subr.mxu0 0.0
        %474 = vmatpush2.msra.mxu0 0.0
        %475 = vmatprep.subr.mxu0 0.0
        %476 = vmatpush2.msra.mxu0 0.0
        %477 = vmatprep.subr.mxu0 0.0
        %478 = vmatpush2.msra.mxu0 0.0
        %479 = vmatprep.subr.mxu0 0.0
        %480 = vmatpush2.msra.mxu0 0.0
        %481 = vmatprep.subr.mxu0 0.0
        %482 = vmatpush2.msra.mxu0 0.0
        %483 = vmatprep.subr.mxu0 0.0
        %484 = vmatpush2.msra.mxu0 0.0
        %485 = vmatprep.subr.mxu0 0.0
        %486 = vmatpush2.msra.mxu0 0.0
        %487 = vmatprep.subr.mxu0 0.0
        %488 = vmatpush2.msra.mxu0 0.0
        %489 = vmatprep.subr.mxu0 0.0
        %490 = vmatpush2.msra.mxu0 0.0
        %491 = vmatprep.subr.mxu0 0.0
        %492 = vmatpush2.msra.mxu0 0.0
        %493 = vmatprep.subr.mxu0 0.0
        %494 = vmatpush2.msra.mxu0 0.0
        %495 = vmatprep.subr.mxu0 0.0
        %496 = vmatpush2.msra.mxu0 0.0
        %497 = vmatprep.subr.mxu0 0.0
        %498 = vmatpush2.msra.mxu0 0.0
        %499 = vmatprep.subr.mxu0 0.0
        %500 = vmatpush2.msra.mxu0 0.0
        %501 = vmatprep.subr.mxu0 0.0
        %502 = vmatpush2.msra.mxu0 0.0
        %503 = vmatprep.subr.mxu0 0.0
        %504 = vmatpush2.msra.mxu0 0.0
        %505 = vmatprep.mubr.f32.mxu0 0.0
        %506 = vmatmul.mubr.f32.gmra.mxu0 %v246
        %v507 = vpop.f32.mrf.mxu0
        %v508 = vadd.f32 %v242, %v507
        %v509 = vpop.f32.mrf.mxu0
        %510 = vmatprep.mubr.f32.mxu0 0.0
        %511 = vmatmul.mubr.f32.gmra.mxu0 %v249
        %v512 = vpop.f32.mrf.mxu0
        %v513 = vadd.f32 %v242, %v512
        %v514 = vpop.f32.mrf.mxu0
        %515 = vmatprep.mubr.f32.mxu0 0.0
        %516 = vmatmul.mubr.f32.gmra.mxu0 %v252
        %v517 = vpop.f32.mrf.mxu0
        %v518 = vadd.f32 %v242, %v517
        %v519 = vpop.f32.mrf.mxu0
        %520 = vmatprep.mubr.f32.mxu0 0.0
        %521 = vmatmul.mubr.f32.gmra.mxu0 %v255
        %v522 = vpop.f32.mrf.mxu0
        %v523 = vadd.f32 %v242, %v522
        %v524 = vpop.f32.mrf.mxu0
        %525 = vmatprep.mubr.f32.mxu0 0.0
        %526 = vmatmul.mubr.f32.gmra.mxu0 %v258
        %v527 = vpop.f32.mrf.mxu0
        %v528 = vadd.f32 %v242, %v527
        %v529 = vpop.f32.mrf.mxu0
        %530 = vmatprep.mubr.f32.mxu0 0.0
        %531 = vmatmul.mubr.f32.gmra.mxu0 %v261
        %v532 = vpop.f32.mrf.mxu0
        %v533 = vadd.f32 %v242, %v532
        %v534 = vpop.f32.mrf.mxu0
        %535 = vmatprep.mubr.f32.mxu0 0.0
        %536 = vmatmul.mubr.f32.gmra.mxu0 %v264
        %v537 = vpop.f32.mrf.mxu0
        %v538 = vadd.f32 %v242, %v537
        %v539 = vpop.f32.mrf.mxu0
        %540 = vmatprep.mubr.f32.mxu0 0.0
        %541 = vmatmul.mubr.f32.gmra.mxu0 %v267
        %v542 = vpop.f32.mrf.mxu0
        %v543 = vadd.f32 %v242, %v542
        %v544 = vpop.f32.mrf.mxu0
        %545 = vmatprep.mubr.f32.mxu0 0.0
        %546 = vmatmul.mubr.f32.gmra.mxu0 %v270
        %v547 = vpop.f32.mrf.mxu0
        %v548 = vadd.f32 %v242, %v547
        %v549 = vpop.f32.mrf.mxu0
        %550 = vmatprep.mubr.f32.mxu0 0.0
        %551 = vmatmul.mubr.f32.gmra.mxu0 %v273
        %v552 = vpop.f32.mrf.mxu0
        %v553 = vadd.f32 %v242, %v552
        %v554 = vpop.f32.mrf.mxu0
        %555 = vmatprep.mubr.f32.mxu0 0.0
        %556 = vmatmul.mubr.f32.gmra.mxu0 %v276
        %v557 = vpop.f32.mrf.mxu0
        %v558 = vadd.f32 %v242, %v557
        %v559 = vpop.f32.mrf.mxu0
        %560 = vmatprep.mubr.f32.mxu0 0.0
        %561 = vmatmul.mubr.f32.gmra.mxu0 %v279
        %v562 = vpop.f32.mrf.mxu0
        %v563 = vadd.f32 %v242, %v562
        %v564 = vpop.f32.mrf.mxu0
        %565 = vmatprep.mubr.f32.mxu0 0.0
        %566 = vmatmul.mubr.f32.gmra.mxu0 %v282
        %v567 = vpop.f32.mrf.mxu0
        %v568 = vadd.f32 %v242, %v567
        %v569 = vpop.f32.mrf.mxu0
        %570 = vmatprep.mubr.f32.mxu0 0.0
        %571 = vmatmul.mubr.f32.gmra.mxu0 %v285
        %v572 = vpop.f32.mrf.mxu0
        %v573 = vadd.f32 %v242, %v572
        %v574 = vpop.f32.mrf.mxu0
        %575 = vmatprep.mubr.f32.mxu0 0.0
        %576 = vmatmul.mubr.f32.gmra.mxu0 %v288
        %v577 = vpop.f32.mrf.mxu0
        %v578 = vadd.f32 %v242, %v577
        %v579 = vpop.f32.mrf.mxu0
        %580 = vmatprep.mubr.f32.mxu0 0.0
        %581 = vmatmul.mubr.f32.gmra.mxu0 %v291
        %v582 = vpop.f32.mrf.mxu0
        %v583 = vadd.f32 %v242, %v582
        %v584 = vpop.f32.mrf.mxu0
        %585 = vmatprep.mubr.f32.mxu0 0.0
        %586 = vmatmul.mubr.f32.gmra.mxu0 %v294
        %v587 = vpop.f32.mrf.mxu0
        %v588 = vadd.f32 %v242, %v587
        %v589 = vpop.f32.mrf.mxu0
        %590 = vmatprep.mubr.f32.mxu0 0.0
        %591 = vmatmul.mubr.f32.gmra.mxu0 %v297
        %v592 = vpop.f32.mrf.mxu0
        %v593 = vadd.f32 %v242, %v592
        %v594 = vpop.f32.mrf.mxu0
        %595 = vmatprep.mubr.f32.mxu0 0.0
        %596 = vmatmul.mubr.f32.gmra.mxu0 %v300
        %v597 = vpop.f32.mrf.mxu0
        %v598 = vadd.f32 %v242, %v597
        %v599 = vpop.f32.mrf.mxu0
        %600 = vmatprep.mubr.f32.mxu0 0.0
        %601 = vmatmul.mubr.f32.gmra.mxu0 %v303
        %v602 = vpop.f32.mrf.mxu0
        %v603 = vadd.f32 %v242, %v602
        %v604 = vpop.f32.mrf.mxu0
        %605 = vmatprep.mubr.f32.mxu0 0.0
        %606 = vmatmul.mubr.f32.gmra.mxu0 %v306
        %v607 = vpop.f32.mrf.mxu0
        %v608 = vadd.f32 %v242, %v607
        %v609 = vpop.f32.mrf.mxu0
        %610 = vmatprep.mubr.f32.mxu0 0.0
        %611 = vmatmul.mubr.f32.gmra.mxu0 %v309
        %v612 = vpop.f32.mrf.mxu0
        %v613 = vadd.f32 %v242, %v612
        %v614 = vpop.f32.mrf.mxu0
        %615 = vmatprep.mubr.f32.mxu0 0.0
        %616 = vmatmul.mubr.f32.gmra.mxu0 %v312
        %v617 = vpop.f32.mrf.mxu0
        %v618 = vadd.f32 %v242, %v617
        %v619 = vpop.f32.mrf.mxu0
        %620 = vmatprep.mubr.f32.mxu0 0.0
        %621 = vmatmul.mubr.f32.gmra.mxu0 %v315
        %v622 = vpop.f32.mrf.mxu0
        %v623 = vadd.f32 %v242, %v622
        %v624 = vpop.f32.mrf.mxu0
        %625 = vmatprep.mubr.f32.mxu0 0.0
        %626 = vmatmul.mubr.f32.gmra.mxu0 %v318
        %v627 = vpop.f32.mrf.mxu0
        %v628 = vadd.f32 %v242, %v627
        %v629 = vpop.f32.mrf.mxu0
        %630 = vmatprep.mubr.f32.mxu0 0.0
        %631 = vmatmul.mubr.f32.gmra.mxu0 %v321
        %v632 = vpop.f32.mrf.mxu0
        %v633 = vadd.f32 %v242, %v632
        %v634 = vpop.f32.mrf.mxu0
        %635 = vmatprep.mubr.f32.mxu0 0.0
        %636 = vmatmul.mubr.f32.gmra.mxu0 %v324
        %v637 = vpop.f32.mrf.mxu0
        %v638 = vadd.f32 %v242, %v637
        %v639 = vpop.f32.mrf.mxu0
        %640 = vmatprep.mubr.f32.mxu0 0.0
        %641 = vmatmul.mubr.f32.gmra.mxu0 %v327
        %v642 = vpop.f32.mrf.mxu0
        %v643 = vadd.f32 %v242, %v642
        %v644 = vpop.f32.mrf.mxu0
        %645 = vmatprep.mubr.f32.mxu0 0.0
        %646 = vmatmul.mubr.f32.gmra.mxu0 %v330
        %v647 = vpop.f32.mrf.mxu0
        %v648 = vadd.f32 %v242, %v647
        %v649 = vpop.f32.mrf.mxu0
        %650 = vmatprep.mubr.f32.mxu0 0.0
        %651 = vmatmul.mubr.f32.gmra.mxu0 %v333
        %v652 = vpop.f32.mrf.mxu0
        %v653 = vadd.f32 %v242, %v652
        %v654 = vpop.f32.mrf.mxu0
        %655 = vmatprep.mubr.f32.mxu0 0.0
        %656 = vmatmul.mubr.f32.gmra.mxu0 %v336
        %v657 = vpop.f32.mrf.mxu0
        %v658 = vadd.f32 %v242, %v657
        %v659 = vpop.f32.mrf.mxu0
        %660 = vmatprep.mubr.f32.mxu0 0.0
        %661 = vmatmul.mubr.f32.gmra.mxu0 %v339
        %v662 = vpop.f32.mrf.mxu0
        %v663 = vadd.f32 %v242, %v662
        %v664 = vpop.f32.mrf.mxu0
        %665 = vmatprep.mubr.f32.mxu0 0.0
        %666 = vmatmul.mubr.f32.gmra.mxu0 %v342
        %v667 = vpop.f32.mrf.mxu0
        %v668 = vadd.f32 %v242, %v667
        %v669 = vpop.f32.mrf.mxu0
        %670 = vmatprep.mubr.f32.mxu0 0.0
        %671 = vmatmul.mubr.f32.gmra.mxu0 %v345
        %v672 = vpop.f32.mrf.mxu0
        %v673 = vadd.f32 %v242, %v672
        %v674 = vpop.f32.mrf.mxu0
        %675 = vmatprep.mubr.f32.mxu0 0.0
        %676 = vmatmul.mubr.f32.gmra.mxu0 %v348
        %v677 = vpop.f32.mrf.mxu0
        %v678 = vadd.f32 %v242, %v677
        %v679 = vpop.f32.mrf.mxu0
        %680 = vmatprep.mubr.f32.mxu0 0.0
        %681 = vmatmul.mubr.f32.gmra.mxu0 %v351
        %v682 = vpop.f32.mrf.mxu0
        %v683 = vadd.f32 %v242, %v682
        %v684 = vpop.f32.mrf.mxu0
        %685 = vmatprep.mubr.f32.mxu0 0.0
        %686 = vmatmul.mubr.f32.gmra.mxu0 %v354
        %v687 = vpop.f32.mrf.mxu0
        %v688 = vadd.f32 %v242, %v687
        %v689 = vpop.f32.mrf.mxu0
        %690 = vmatprep.mubr.f32.mxu0 0.0
        %691 = vmatmul.mubr.f32.gmra.mxu0 %v357
        %v692 = vpop.f32.mrf.mxu0
        %v693 = vadd.f32 %v242, %v692
        %v694 = vpop.f32.mrf.mxu0
        %695 = vmatprep.mubr.f32.mxu0 0.0
        %696 = vmatmul.mubr.f32.gmra.mxu0 %v360
        %v697 = vpop.f32.mrf.mxu0
        %v698 = vadd.f32 %v242, %v697
        %v699 = vpop.f32.mrf.mxu0
        %700 = vmatprep.mubr.f32.mxu0 0.0
        %701 = vmatmul.mubr.f32.gmra.mxu0 %v363
        %v702 = vpop.f32.mrf.mxu0
        %v703 = vadd.f32 %v242, %v702
        %v704 = vpop.f32.mrf.mxu0
        %705 = vmatprep.mubr.f32.mxu0 0.0
        %706 = vmatmul.mubr.f32.gmra.mxu0 %v366
        %v707 = vpop.f32.mrf.mxu0
        %v708 = vadd.f32 %v242, %v707
        %v709 = vpop.f32.mrf.mxu0
        %710 = vmatprep.mubr.f32.mxu0 0.0
        %711 = vmatmul.mubr.f32.gmra.mxu0 %v369
        %v712 = vpop.f32.mrf.mxu0
        %v713 = vadd.f32 %v242, %v712
        %v714 = vpop.f32.mrf.mxu0
        %715 = vmatprep.mubr.f32.mxu0 0.0
        %716 = vmatmul.mubr.f32.gmra.mxu0 %v372
        %v717 = vpop.f32.mrf.mxu0
        %v718 = vadd.f32 %v242, %v717
        %v719 = vpop.f32.mrf.mxu0
        %720 = vmatprep.mubr.f32.mxu0 0.0
        %721 = vmatmul.mubr.f32.gmra.mxu0 %v375
        %v722 = vpop.f32.mrf.mxu0
        %v723 = vadd.f32 %v242, %v722
        %v724 = vpop.f32.mrf.mxu0
        %725 = vmatprep.mubr.f32.mxu0 0.0
        %726 = vmatmul.mubr.f32.gmra.mxu0 %v378
        %v727 = vpop.f32.mrf.mxu0
        %v728 = vadd.f32 %v242, %v727
        %v729 = vpop.f32.mrf.mxu0
        %730 = vmatprep.mubr.f32.mxu0 0.0
        %731 = vmatmul.mubr.f32.gmra.mxu0 %v381
        %v732 = vpop.f32.mrf.mxu0
        %v733 = vadd.f32 %v242, %v732
        %v734 = vpop.f32.mrf.mxu0
        %735 = vmatprep.mubr.f32.mxu0 0.0
        %736 = vmatmul.mubr.f32.gmra.mxu0 %v384
        %v737 = vpop.f32.mrf.mxu0
        %v738 = vadd.f32 %v242, %v737
        %v739 = vpop.f32.mrf.mxu0
        %740 = vmatprep.mubr.f32.mxu0 0.0
        %741 = vmatmul.mubr.f32.gmra.mxu0 %v387
        %v742 = vpop.f32.mrf.mxu0
        %v743 = vadd.f32 %v242, %v742
        %v744 = vpop.f32.mrf.mxu0
        %745 = vmatprep.mubr.f32.mxu0 0.0
        %746 = vmatmul.mubr.f32.gmra.mxu0 %v390
        %v747 = vpop.f32.mrf.mxu0
        %v748 = vadd.f32 %v242, %v747
        %v749 = vpop.f32.mrf.mxu0
        %750 = vmatprep.mubr.f32.mxu0 0.0
        %751 = vmatmul.mubr.f32.gmra.mxu0 %v393
        %v752 = vpop.f32.mrf.mxu0
        %v753 = vadd.f32 %v242, %v752
        %v754 = vpop.f32.mrf.mxu0
        %755 = vmatprep.mubr.f32.mxu0 0.0
        %756 = vmatmul.mubr.f32.gmra.mxu0 %v396
        %v757 = vpop.f32.mrf.mxu0
        %v758 = vadd.f32 %v242, %v757
        %v759 = vpop.f32.mrf.mxu0
        %760 = vmatprep.mubr.f32.mxu0 0.0
        %761 = vmatmul.mubr.f32.gmra.mxu0 %v399
        %v762 = vpop.f32.mrf.mxu0
        %v763 = vadd.f32 %v242, %v762
        %v764 = vpop.f32.mrf.mxu0
        %765 = vmatprep.mubr.f32.mxu0 0.0
        %766 = vmatmul.mubr.f32.gmra.mxu0 %v402
        %v767 = vpop.f32.mrf.mxu0
        %v768 = vadd.f32 %v242, %v767
        %v769 = vpop.f32.mrf.mxu0
        %770 = vmatprep.mubr.f32.mxu0 0.0
        %771 = vmatmul.mubr.f32.gmra.mxu0 %v405
        %v772 = vpop.f32.mrf.mxu0
        %v773 = vadd.f32 %v242, %v772
        %v774 = vpop.f32.mrf.mxu0
        %775 = vmatprep.mubr.f32.mxu0 0.0
        %776 = vmatmul.mubr.f32.gmra.mxu0 %v408
        %v777 = vpop.f32.mrf.mxu0
        %v778 = vadd.f32 %v242, %v777
        %v779 = vpop.f32.mrf.mxu0
        %780 = vmatprep.mubr.f32.mxu0 0.0
        %781 = vmatmul.mubr.f32.gmra.mxu0 %v411
        %v782 = vpop.f32.mrf.mxu0
        %v783 = vadd.f32 %v242, %v782
        %v784 = vpop.f32.mrf.mxu0
        %785 = vmatprep.mubr.f32.mxu0 0.0
        %786 = vmatmul.mubr.f32.gmra.mxu0 %v414
        %v787 = vpop.f32.mrf.mxu0
        %v788 = vadd.f32 %v242, %v787
        %v789 = vpop.f32.mrf.mxu0
        %790 = vmatprep.mubr.f32.mxu0 0.0
        %791 = vmatmul.mubr.f32.gmra.mxu0 %v417
        %v792 = vpop.f32.mrf.mxu0
        %v793 = vadd.f32 %v242, %v792
        %v794 = vpop.f32.mrf.mxu0
        %795 = vmatprep.mubr.f32.mxu0 0.0
        %796 = vmatmul.mubr.f32.gmra.mxu0 %v420
        %v797 = vpop.f32.mrf.mxu0
        %v798 = vadd.f32 %v242, %v797
        %v799 = vpop.f32.mrf.mxu0
        %800 = vmatprep.mubr.f32.mxu0 0.0
        %801 = vmatmul.mubr.f32.gmra.mxu0 %v423
        %v802 = vpop.f32.mrf.mxu0
        %v803 = vadd.f32 %v242, %v802
        %v804 = vpop.f32.mrf.mxu0
        %805 = vmatprep.mubr.f32.mxu0 0.0
        %806 = vmatmul.mubr.f32.gmra.mxu0 %v426
        %v807 = vpop.f32.mrf.mxu0
        %v808 = vadd.f32 %v242, %v807
        %v809 = vpop.f32.mrf.mxu0
        %810 = vmatprep.mubr.f32.mxu0 0.0
        %811 = vmatmul.mubr.f32.gmra.mxu0 %v429
        %v812 = vpop.f32.mrf.mxu0
        %v813 = vadd.f32 %v242, %v812
        %v814 = vpop.f32.mrf.mxu0
        %815 = vmatprep.mubr.f32.mxu0 0.0
        %816 = vmatmul.mubr.f32.gmra.mxu0 %v432
        %v817 = vpop.f32.mrf.mxu0
        %v818 = vadd.f32 %v242, %v817
        %v819 = vpop.f32.mrf.mxu0
        %820 = vmatprep.mubr.f32.mxu0 0.0
        %821 = vmatmul.mubr.f32.gmra.mxu0 %v435
        %v822 = vpop.f32.mrf.mxu0
        %v823 = vadd.f32 %v242, %v822
        %v824 = vpop.f32.mrf.mxu0
        %825 = vdwg.mxu0
        %v826 = vtanh.pop %v508
        %v827 = vtanh.pop %v513
        %v828 = vtanh.pop %v518
        %v829 = vtanh.pop %v523
        %v830 = vtanh.pop %v528
        %v831 = vtanh.pop %v533
        %v832 = vtanh.pop %v538
        %v833 = vtanh.pop %v543
        %v834 = vtanh.pop %v548
        %v835 = vtanh.pop %v553
        %v836 = vtanh.pop %v558
        %v837 = vtanh.pop %v563
        %v838 = vtanh.pop %v568
        %v839 = vtanh.pop %v573
        %v840 = vtanh.pop %v578
        %v841 = vtanh.pop %v583
        %v842 = vtanh.pop %v588
        %v843 = vtanh.pop %v593
        %v844 = vtanh.pop %v598
        %v845 = vtanh.pop %v603
        %v846 = vtanh.pop %v608
        %v847 = vtanh.pop %v613
        %v848 = vtanh.pop %v618
        %v849 = vtanh.pop %v623
        %v850 = vtanh.pop %v628
        %v851 = vtanh.pop %v633
        %v852 = vtanh.pop %v638
        %v853 = vtanh.pop %v643
        %v854 = vtanh.pop %v648
        %v855 = vtanh.pop %v653
        %v856 = vtanh.pop %v658
        %v857 = vtanh.pop %v663
        %v858 = vtanh.pop %v668
        %v859 = vtanh.pop %v673
        %v860 = vtanh.pop %v678
        %v861 = vtanh.pop %v683
        %v862 = vtanh.pop %v688
        %v863 = vtanh.pop %v693
        %v864 = vtanh.pop %v698
        %v865 = vtanh.pop %v703
        %v866 = vtanh.pop %v708
        %v867 = vtanh.pop %v713
        %v868 = vtanh.pop %v718
        %v869 = vtanh.pop %v723
        %v870 = vtanh.pop %v728
        %v871 = vtanh.pop %v733
        %v872 = vtanh.pop %v738
        %v873 = vtanh.pop %v743
        %v874 = vtanh.pop %v748
        %v875 = vtanh.pop %v753
        %v876 = vtanh.pop %v758
        %v877 = vtanh.pop %v763
        %v878 = vtanh.pop %v768
        %v879 = vtanh.pop %v773
        %v880 = vtanh.pop %v778
        %v881 = vtanh.pop %v783
        %v882 = vtanh.pop %v788
        %v883 = vtanh.pop %v793
        %v884 = vtanh.pop %v798
        %v885 = vtanh.pop %v803
        %v886 = vtanh.pop %v808
        %v887 = vtanh.pop %v813
        %v888 = vtanh.pop %v818
        %v889 = vtanh.pop %v823
        %890 = vst [vmem:[%s164] sm:$0xff] %v826
        %891 = vst [vmem:[%s164 + $0x8] sm:$0xff] %v827
        %892 = vst [vmem:[%s164 + $0x10] sm:$0xff] %v828
        %893 = vst [vmem:[%s164 + $0x18] sm:$0xff] %v829
        %894 = vst [vmem:[%s164 + $0x20] sm:$0xff] %v830
        %895 = vst [vmem:[%s164 + $0x28] sm:$0xff] %v831
        %896 = vst [vmem:[%s164 + $0x30] sm:$0xff] %v832
        %897 = vst [vmem:[%s164 + $0x38] sm:$0xff] %v833
        %898 = vst [vmem:[%s164 + $0x40] sm:$0xff] %v834
        %899 = vst [vmem:[%s164 + $0x48] sm:$0xff] %v835
        %900 = vst [vmem:[%s164 + $0x50] sm:$0xff] %v836
        %901 = vst [vmem:[%s164 + $0x58] sm:$0xff] %v837
        %902 = vst [vmem:[%s164 + $0x60] sm:$0xff] %v838
        %903 = vst [vmem:[%s164 + $0x68] sm:$0xff] %v839
        %904 = vst [vmem:[%s164 + $0x70] sm:$0xff] %v840
        %905 = vst [vmem:[%s164 + $0x78] sm:$0xff] %v841
        %906 = vst [vmem:[%s164 + $0x80] sm:$0xff] %v842
        %907 = vst [vmem:[%s164 + $0x88] sm:$0xff] %v843
        %908 = vst [vmem:[%s164 + $0x90] sm:$0xff] %v844
        %909 = vst [vmem:[%s164 + $0x98] sm:$0xff] %v845
        %910 = vst [vmem:[%s164 + $0xa0] sm:$0xff] %v846
        %911 = vst [vmem:[%s164 + $0xa8] sm:$0xff] %v847
        %912 = vst [vmem:[%s164 + $0xb0] sm:$0xff] %v848
        %913 = vst [vmem:[%s164 + $0xb8] sm:$0xff] %v849
        %914 = vst [vmem:[%s164 + $0xc0] sm:$0xff] %v850
        %915 = vst [vmem:[%s164 + $0xc8] sm:$0xff] %v851
        %916 = vst [vmem:[%s164 + $0xd0] sm:$0xff] %v852
        %917 = vst [vmem:[%s164 + $0xd8] sm:$0xff] %v853
        %918 = vst [vmem:[%s164 + $0xe0] sm:$0xff] %v854
        %919 = vst [vmem:[%s164 + $0xe8] sm:$0xff] %v855
        %920 = vst [vmem:[%s164 + $0xf0] sm:$0xff] %v856
        %921 = vst [vmem:[%s164 + $0xf8] sm:$0xff] %v857
        %922 = vst [vmem:[%s164 + $0x100] sm:$0xff] %v858
        %923 = vst [vmem:[%s164 + $0x108] sm:$0xff] %v859
        %924 = vst [vmem:[%s164 + $0x110] sm:$0xff] %v860
        %925 = vst [vmem:[%s164 + $0x118] sm:$0xff] %v861
        %926 = vst [vmem:[%s164 + $0x120] sm:$0xff] %v862
        %927 = vst [vmem:[%s164 + $0x128] sm:$0xff] %v863
        %928 = vst [vmem:[%s164 + $0x130] sm:$0xff] %v864
        %929 = vst [vmem:[%s164 + $0x138] sm:$0xff] %v865
        %930 = vst [vmem:[%s164 + $0x140] sm:$0xff] %v866
        %931 = vst [vmem:[%s164 + $0x148] sm:$0xff] %v867
        %932 = vst [vmem:[%s164 + $0x150] sm:$0xff] %v868
        %933 = vst [vmem:[%s164 + $0x158] sm:$0xff] %v869
        %934 = vst [vmem:[%s164 + $0x160] sm:$0xff] %v870
        %935 = vst [vmem:[%s164 + $0x168] sm:$0xff] %v871
        %936 = vst [vmem:[%s164 + $0x170] sm:$0xff] %v872
        %937 = vst [vmem:[%s164 + $0x178] sm:$0xff] %v873
        %938 = vst [vmem:[%s164 + $0x180] sm:$0xff] %v874
        %939 = vst [vmem:[%s164 + $0x188] sm:$0xff] %v875
        %940 = vst [vmem:[%s164 + $0x190] sm:$0xff] %v876
        %941 = vst [vmem:[%s164 + $0x198] sm:$0xff] %v877
        %942 = vst [vmem:[%s164 + $0x1a0] sm:$0xff] %v878
        %943 = vst [vmem:[%s164 + $0x1a8] sm:$0xff] %v879
        %944 = vst [vmem:[%s164 + $0x1b0] sm:$0xff] %v880
        %945 = vst [vmem:[%s164 + $0x1b8] sm:$0xff] %v881
        %946 = vst [vmem:[%s164 + $0x1c0] sm:$0xff] %v882
        %947 = vst [vmem:[%s164 + $0x1c8] sm:$0xff] %v883
        %948 = vst [vmem:[%s164 + $0x1d0] sm:$0xff] %v884
        %949 = vst [vmem:[%s164 + $0x1d8] sm:$0xff] %v885
        %950 = vst [vmem:[%s164 + $0x1e0] sm:$0xff] %v886
        %951 = vst [vmem:[%s164 + $0x1e8] sm:$0xff] %v887
        %952 = vst [vmem:[%s164 + $0x1f0] sm:$0xff] %v888
        %953 = vst [vmem:[%s164 + $0x1f8] sm:$0xff] %v889
        %s954 = sand.u32 %s93, 1
        %s955 = scalar_lea.sflag [#allocation3], %s954
        %s956 = sand.u32 %s93, 1
        %s957 = smul.addr %s956, 512
        %s958 = scalar_lea.vmem [#allocation2], %s957
        // Predicated region
        $region33: #{tpu_custom_call.1} parent=31 // pred_check
          %p959 = pneg %p103
        $region34: #{tpu_custom_call.1} parent=31 // pred_check_branch
          %961 = sbr.rel (%p959) target = $region36
        $region35: #{tpu_custom_call.1} parent=31 // pred_region
          %s962 = smul.u32 64, %s17
          %s964 = ssub.s32 8192, 8192
          %965 = vsyncadd %s955, %s964
          %s966 = smul.addr %s962, 128
          %s967 = scalar_lea.hbm %s3, %s966
          %s968 = sshll.u32 %s958, 4
          %s969 = int_to_ptr.vmem [resolvable:$true] %s968
          %974 = dma.vmem_to_hbm [thread:$0]  %s969, 8192, %s967, %s955, 128, 128, 8
        $region36: #{tpu_custom_call.1} parent=31 // pred_fallthru
          _
      $region32: #{tpu_custom_call.1} parent=5 // pred_fallthru
        _
      %p975 = scmp.le.s32.totalorder 2, %s12
      // Predicated region
      $region37: #{tpu_custom_call.1} parent=5 // pred_check
        %p976 = pneg %p975
      $region38: #{tpu_custom_call.1} parent=5 // pred_check_branch
        %978 = sbr.rel (%p976) target = $region40
      $region39: #{tpu_custom_call.1} parent=5 // pred_region
        %s979 = ssub.s32 %s12, 2
        // Predicated region
        $region41: #{tpu_custom_call.1} parent=39 // pred_check
          %p980 = pneg %p109
        $region42: #{tpu_custom_call.1} parent=39 // pred_check_branch
          %982 = sbr.rel (%p980) target = $region44
        $region43: #{tpu_custom_call.1} parent=39 // pred_region
          %s983 = sand.u32 %s94, 1
          %s984 = scalar_lea.sflag [#allocation3], %s983
          %s985 = sand.u32 %s94, 1
          %s986 = smul.addr %s985, 512
          %s987 = scalar_lea.vmem [#allocation2], %s986
          %988 = dma.done %s984, 8192
        $region44: #{tpu_custom_call.1} parent=39 // pred_fallthru
          _
      $region40: #{tpu_custom_call.1} parent=5 // pred_fallthru
        _
    $region6: #{tpu_custom_call.1} parent=1 // loop_footer
      %s16 = sadd.s32 1, %s12
    $region7: #{tpu_custom_call.1} parent=1 // loop_footer_branch
      %11 = sbr.rel target = $region3
    $region8: #{tpu_custom_call.1} parent=1 // loop_exit
      _
    %989 = vsyncpa [#allocation3], 1
    %s990 = scalar_lea.sflag [#allocation3], 1
    %991 = vsyncpa %s990, 1

</llo_original>
